<compile_context>
chip_gen: v7x
topology: tpu7x:2x2x1
jax: 0.10.0
libtpu: 0.0.40
codegen_flags: <defaults>
</compile_context>

<pallas_src>
import jax
import jax.numpy as jnp
from jax.experimental import pallas as pl
from jax.experimental.pallas import tpu as pltpu

N_FEATURES = 20          # stands in for features.shape[1] from the dropped-column csv
HIDDEN = (256, 128, 64, 32)
N_CLASSES = 3
BN_EPS = 1e-5
LRELU_SLOPE = 0.1

# Padded (lane-aligned) layer dims used inside the kernel.
IN_PAD = 128             # 20  -> 128 (padded in-kernel)
H0 = 256
H1 = 128
H2_PAD = 128             # 64  -> 128
H3_PAD = 128             # 32  -> 128
OUT_PAD = 128            # 3   -> 128 (lane-dense output store)

_RAW_DIMS = [(N_FEATURES, 256), (256, 128), (128, 64), (64, 32), (32, N_CLASSES)]
_PAD_DIMS = [(IN_PAD, H0), (H0, H1), (H1, H2_PAD), (H2_PAD, H3_PAD), (H3_PAD, OUT_PAD)]

MAX_TILE_B = 1024        # amortizes ~0.35us/step grid overhead; << v5e 16 MiB scoped VMEM
SPLIT_THRESHOLD = 512    # above this, use >=2 tiles so both v7x TensorCores get work


def _round_up(n, m):
    return ((n + m - 1) // m) * m


def _choose_tile_b(batch):
    """Static tile pick (shapes are static under jit).

    - tiny batch: one right-sized tile (multiple of 16 keeps bf16 out tiles aligned)
    - large batch: split into >=2 tiles for v7x dual-TC, capped for v5e VMEM.
    """
    b16 = _round_up(max(batch, 1), 16)
    if b16 <= SPLIT_THRESHOLD:
        return b16                       # small-batch fast path
    half = _round_up((b16 + 1) // 2, 16)
    return min(half, MAX_TILE_B)


def _mlp_kernel(x_ref,
                w0_ref, b0_ref,
                w1_ref, b1_ref,
                w2_ref, b2_ref,
                w3_ref, b3_ref,
                wo_ref, bo_ref,
                out_ref, xpad_ref):
    """One batch tile: 4x (bf16 matmul -> f32 acc + bias -> LeakyReLU) + output matmul."""

    def lin(h, w_ref, b_ref):
        y = jnp.dot(h, w_ref[...], preferred_element_type=jnp.float32)
        return y + b_ref[...]                      # (1, out) f32 bias broadcasts over rows

    def lrelu(y):
        return jnp.maximum(y, LRELU_SLOPE * y)     # single vmax instead of cmp+select

    # In-kernel 20 -> 128 lane pad (zero-fill) + bf16 cast; no wrapper-side padded-x pass.
    # Re-zero every step: scratch persists across iterations and the grid may be
    # sharded across TensorCores, so a one-time init is not safe.
    xpad_ref[...] = jnp.zeros_like(xpad_ref)
    xpad_ref[:, :N_FEATURES] = x_ref[...]
    h = xpad_ref[...].astype(jnp.bfloat16)                          # (tile_b, 128) bf16

    h = lrelu(lin(h, w0_ref, b0_ref)).astype(jnp.bfloat16)          # fc0+bn0+LReLU (dropout0 id)
    h = lrelu(lin(h, w1_ref, b1_ref)).astype(jnp.bfloat16)          # fc1+bn1+LReLU (dropout1 id)
    h = lrelu(lin(h, w2_ref, b2_ref)).astype(jnp.bfloat16)          # fc2+bn2+LReLU (dropout2 id)
    h = lrelu(lin(h, w3_ref, b3_ref)).astype(jnp.bfloat16)          # fc3+bn3+LReLU (dropout3 id)
    out_ref[...] = lin(h, wo_ref, bo_ref).astype(jnp.bfloat16)      # bf16 lane-dense store


@jax.jit
def soccer_outcome_classifier(x, padded_params):
    """x: (B, N_FEATURES) f32. padded_params: 10 lane-padded arrays (bf16 w, f32 b)."""
    B = x.shape[0]
    tile_b = _choose_tile_b(B)
    n_tiles = pl.cdiv(B, tile_b)
    B_pad = n_tiles * tile_b

    # Only pad dead batch rows (cheap, 20 f32 cols); NO 128-lane padded x in HBM.
    x_p = x if B_pad == B else jnp.pad(x, ((0, B_pad - B), (0, 0)))

    # Batch-tiled x / out; weights & biases pinned in VMEM via constant index_maps
    # (constant block index => fetched once, never re-DMA'd across grid steps).
    x_spec = pl.BlockSpec((tile_b, N_FEATURES), lambda i: (i, 0))
    out_spec = pl.BlockSpec((tile_b, OUT_PAD), lambda i: (i, 0))
    param_specs = [pl.BlockSpec(p.shape, lambda i: (0, 0)) for p in padded_params]

    flops = 2 * B_pad * sum(fi * fo for fi, fo in _PAD_DIMS)
    bytes_accessed = (B_pad * N_FEATURES * 4                                   # x read (f32)
                      + sum(p.size * p.dtype.itemsize for p in padded_params)  # weights/biases
                      + B_pad * OUT_PAD * 2)                                   # bf16 out write

    out = pl.pallas_call(
        _mlp_kernel,
        out_shape=jax.ShapeDtypeStruct((B_pad, OUT_PAD), jnp.bfloat16),
        grid=(n_tiles,),
        in_specs=[x_spec] + param_specs,
        out_specs=out_spec,
        scratch_shapes=[pltpu.VMEM((tile_b, IN_PAD), jnp.float32)],   # in-kernel lane pad
        compiler_params=pltpu.CompilerParams(
            dimension_semantics=("parallel",)),      # shards batch tiles across v7x TCs
        cost_estimate=pl.CostEstimate(
            flops=flops, transcendentals=0, bytes_accessed=bytes_accessed),
    )(x_p, *padded_params)

    return out[:B, :N_CLASSES].astype(jnp.float32)


def _init_params(key):
    """Deterministic parameter construction + BatchNorm folding (eval mode), f32, unpadded."""
    dims = (N_FEATURES,) + HIDDEN
    keys = jax.random.split(key, 32)
    ki = iter(range(32))
    params = []
    # Hidden layers: Linear followed by BatchNorm1d, folded together.
    for li in range(4):
        fan_in, fan_out = dims[li], dims[li + 1]
        w = jax.random.normal(keys[next(ki)], (fan_in, fan_out), jnp.float32) * 0.05
        b = jax.random.normal(keys[next(ki)], (fan_out,), jnp.float32) * 0.05
        gamma = 1.0 + 0.1 * jax.random.normal(keys[next(ki)], (fan_out,), jnp.float32)
        beta = 0.1 * jax.random.normal(keys[next(ki)], (fan_out,), jnp.float32)
        r_mean = 0.1 * jax.random.normal(keys[next(ki)], (fan_out,), jnp.float32)
        r_var = jnp.abs(jax.random.normal(keys[next(ki)], (fan_out,), jnp.float32)) + 0.5
        # Fold BN (eval): scale = gamma / sqrt(var + eps); shift = beta - mean*scale
        scale = gamma / jnp.sqrt(r_var + BN_EPS)
        shift = beta - r_mean * scale
        params += [w * scale[None, :], (b * scale + shift).reshape(1, fan_out)]
    # Output layer (no BN)
    wo = jax.random.normal(keys[next(ki)], (dims[-1], N_CLASSES), jnp.float32) * 0.05
    bo = jax.random.normal(keys[next(ki)], (N_CLASSES,), jnp.float32) * 0.05
    params += [wo, bo.reshape(1, N_CLASSES)]
    return params


def _pad_params(params):
    """Zero-pad every layer to lane-aligned dims; weights -> bf16, biases stay f32."""
    padded = []
    for li in range(5):
        w, b = params[2 * li], params[2 * li + 1]
        (ri, ro), (pi, po) = _RAW_DIMS[li], _PAD_DIMS[li]
        w_p = jnp.zeros((pi, po), jnp.float32).at[:ri, :ro].set(w).astype(jnp.bfloat16)
        b_p = jnp.zeros((1, po), jnp.float32).at[:, :ro].set(b)
        padded += [w_p, b_p]
    return padded


def _bf16_round(v):
    return v.astype(jnp.bfloat16).astype(jnp.float32)


def _reference(x, params):
    """Pure-JAX reference mirroring the kernel's bf16-input / f32-accumulate numerics."""
    h = _bf16_round(x)
    for li in range(4):
        w, b = params[2 * li], params[2 * li + 1]
        y = jnp.dot(h, _bf16_round(w), precision=jax.lax.Precision.HIGHEST) + b
        h = _bf16_round(jnp.maximum(y, LRELU_SLOPE * y))
    y = jnp.dot(h, _bf16_round(params[8]),
                precision=jax.lax.Precision.HIGHEST) + params[9]
    return _bf16_round(y)   # kernel stores bf16 logits


if __name__ == "__main__":
    key = jax.random.PRNGKey(0)
    k_param, k_x = jax.random.split(key)
    params_f32 = _init_params(k_param)
    padded_params = _pad_params(params_f32)

    x = jax.random.normal(k_x, (8, N_FEATURES), jnp.float32)  # small batch of 8 matches

    out = soccer_outcome_classifier(x, padded_params)
    out = jax.block_until_ready(out)

    ref = _reference(x, params_f32)
    assert out.shape == (8, N_CLASSES)
    assert jnp.allclose(out, ref, atol=4e-3, rtol=4e-3), "mismatch vs JAX reference"
    print("KERNEL_OK")
</pallas_src>

<mosaic_0001>
module attributes {stable_mosaic.version = 11 : i64} {
  func.func @_mlp_kernel(%arg0: i32, %arg1: memref<16x20xf32, #tpu.memory_space<vmem>>, %arg2: memref<128x256xbf16, #tpu.memory_space<vmem>>, %arg3: memref<1x256xf32, #tpu.memory_space<vmem>>, %arg4: memref<256x128xbf16, #tpu.memory_space<vmem>>, %arg5: memref<1x128xf32, #tpu.memory_space<vmem>>, %arg6: memref<128x128xbf16, #tpu.memory_space<vmem>>, %arg7: memref<1x128xf32, #tpu.memory_space<vmem>>, %arg8: memref<128x128xbf16, #tpu.memory_space<vmem>>, %arg9: memref<1x128xf32, #tpu.memory_space<vmem>>, %arg10: memref<128x128xbf16, #tpu.memory_space<vmem>>, %arg11: memref<1x128xf32, #tpu.memory_space<vmem>>, %arg12: memref<16x128xbf16, #tpu.memory_space<vmem>>, %arg13: memref<16x128xf32, #tpu.memory_space<vmem>>) attributes {dimension_semantics = [#tpu.dimension_semantics<parallel>], iteration_bounds = array<i64: 1>, scalar_prefetch = 0 : i64, scratch_operands = 1 : i64, tpu.core_type = #tpu.core_type<tc>, window_params = [{transform_indices = @transform_0, window_bounds = array<i64: 16, 20>}, {pipeline_mode = #tpu.pipeline_mode<synchronous>, transform_indices = @transform_1, window_bounds = array<i64: 128, 256>}, {pipeline_mode = #tpu.pipeline_mode<synchronous>, transform_indices = @transform_2, window_bounds = array<i64: 1, 256>}, {pipeline_mode = #tpu.pipeline_mode<synchronous>, transform_indices = @transform_3, window_bounds = array<i64: 256, 128>}, {pipeline_mode = #tpu.pipeline_mode<synchronous>, transform_indices = @transform_4, window_bounds = array<i64: 1, 128>}, {pipeline_mode = #tpu.pipeline_mode<synchronous>, transform_indices = @transform_5, window_bounds = array<i64: 128, 128>}, {pipeline_mode = #tpu.pipeline_mode<synchronous>, transform_indices = @transform_6, window_bounds = array<i64: 1, 128>}, {pipeline_mode = #tpu.pipeline_mode<synchronous>, transform_indices = @transform_7, window_bounds = array<i64: 128, 128>}, {pipeline_mode = #tpu.pipeline_mode<synchronous>, transform_indices = @transform_8, window_bounds = array<i64: 1, 128>}, {pipeline_mode = #tpu.pipeline_mode<synchronous>, transform_indices = @transform_9, window_bounds = array<i64: 128, 128>}, {pipeline_mode = #tpu.pipeline_mode<synchronous>, transform_indices = @transform_10, window_bounds = array<i64: 1, 128>}, {transform_indices = @transform_11, window_bounds = array<i64: 16, 128>}]} {
    %cst = arith.constant 0.000000e+00 : f32
    %0 = vector.broadcast %cst : f32 to vector<16x128xf32>
    %c0 = arith.constant 0 : index
    %c0_0 = arith.constant 0 : index
    %1 = vector.load %arg13[%c0, %c0_0] : memref<16x128xf32, #tpu.memory_space<vmem>>, vector<16x128xf32>
    tpu.vector_store %arg13[%c0, %c0_0], %0 {strides = array<i32>} : memref<16x128xf32, #tpu.memory_space<vmem>>, vector<16x128xf32>,
    %c0_1 = arith.constant 0 : index
    %c0_2 = arith.constant 0 : index
    %2 = vector.load %arg1[%c0_1, %c0_2] : memref<16x20xf32, #tpu.memory_space<vmem>>, vector<16x20xf32>
    %c0_3 = arith.constant 0 : index
    %c0_4 = arith.constant 0 : index
    %3 = vector.load %arg13[%c0_3, %c0_4] : memref<16x128xf32, #tpu.memory_space<vmem>>, vector<16x20xf32>
    tpu.vector_store %arg13[%c0_3, %c0_4], %2 {strides = array<i32>} : memref<16x128xf32, #tpu.memory_space<vmem>>, vector<16x20xf32>,
    %c0_5 = arith.constant 0 : index
    %c0_6 = arith.constant 0 : index
    %4 = vector.load %arg13[%c0_5, %c0_6] : memref<16x128xf32, #tpu.memory_space<vmem>>, vector<16x128xf32>
    %5 = arith.truncf %4 : vector<16x128xf32> to vector<16x128xbf16>
    %c0_7 = arith.constant 0 : index
    %c0_8 = arith.constant 0 : index
    %6 = vector.load %arg2[%c0_7, %c0_8] : memref<128x256xbf16, #tpu.memory_space<vmem>>, vector<128x256xbf16>
    %cst_9 = arith.constant dense<0.000000e+00> : vector<16x256xf32>
    %7 = tpu.matmul %5, %6, %cst_9 {dimension_numbers = #tpu.dot_dimension_numbers<[1], [0], [0], [1], [0, 0, 1, 1], [], []>} : vector<16x128xbf16>, vector<128x256xbf16>, vector<16x256xf32> -> vector<16x256xf32>
    %c0_10 = arith.constant 0 : index
    %c0_11 = arith.constant 0 : index
    %8 = vector.load %arg3[%c0_10, %c0_11] : memref<1x256xf32, #tpu.memory_space<vmem>>, vector<1x256xf32>
    %9 = vector.broadcast %8 : vector<1x256xf32> to vector<16x256xf32>
    %10 = arith.addf %7, %9 : vector<16x256xf32>
    %cst_12 = arith.constant 1.000000e-01 : f32
    %11 = vector.broadcast %cst_12 : f32 to vector<16x256xf32>
    %12 = arith.mulf %11, %10 : vector<16x256xf32>
    %13 = arith.maximumf %10, %12 : vector<16x256xf32>
    %14 = arith.truncf %13 : vector<16x256xf32> to vector<16x256xbf16>
    %c0_13 = arith.constant 0 : index
    %c0_14 = arith.constant 0 : index
    %15 = vector.load %arg4[%c0_13, %c0_14] : memref<256x128xbf16, #tpu.memory_space<vmem>>, vector<256x128xbf16>
    %cst_15 = arith.constant dense<0.000000e+00> : vector<16x128xf32>
    %16 = tpu.matmul %14, %15, %cst_15 {dimension_numbers = #tpu.dot_dimension_numbers<[1], [0], [0], [1], [0, 0, 1, 1], [], []>} : vector<16x256xbf16>, vector<256x128xbf16>, vector<16x128xf32> -> vector<16x128xf32>
    %c0_16 = arith.constant 0 : index
    %c0_17 = arith.constant 0 : index
    %17 = vector.load %arg5[%c0_16, %c0_17] : memref<1x128xf32, #tpu.memory_space<vmem>>, vector<1x128xf32>
    %18 = vector.broadcast %17 : vector<1x128xf32> to vector<16x128xf32>
    %19 = arith.addf %16, %18 : vector<16x128xf32>
    %cst_18 = arith.constant 1.000000e-01 : f32
    %20 = vector.broadcast %cst_18 : f32 to vector<16x128xf32>
    %21 = arith.mulf %20, %19 : vector<16x128xf32>
    %22 = arith.maximumf %19, %21 : vector<16x128xf32>
    %23 = arith.truncf %22 : vector<16x128xf32> to vector<16x128xbf16>
    %c0_19 = arith.constant 0 : index
    %c0_20 = arith.constant 0 : index
    %24 = vector.load %arg6[%c0_19, %c0_20] : memref<128x128xbf16, #tpu.memory_space<vmem>>, vector<128x128xbf16>
    %cst_21 = arith.constant dense<0.000000e+00> : vector<16x128xf32>
    %25 = tpu.matmul %23, %24, %cst_21 {dimension_numbers = #tpu.dot_dimension_numbers<[1], [0], [0], [1], [0, 0, 1, 1], [], []>} : vector<16x128xbf16>, vector<128x128xbf16>, vector<16x128xf32> -> vector<16x128xf32>
    %c0_22 = arith.constant 0 : index
    %c0_23 = arith.constant 0 : index
    %26 = vector.load %arg7[%c0_22, %c0_23] : memref<1x128xf32, #tpu.memory_space<vmem>>, vector<1x128xf32>
    %27 = vector.broadcast %26 : vector<1x128xf32> to vector<16x128xf32>
    %28 = arith.addf %25, %27 : vector<16x128xf32>
    %cst_24 = arith.constant 1.000000e-01 : f32
    %29 = vector.broadcast %cst_24 : f32 to vector<16x128xf32>
    %30 = arith.mulf %29, %28 : vector<16x128xf32>
    %31 = arith.maximumf %28, %30 : vector<16x128xf32>
    %32 = arith.truncf %31 : vector<16x128xf32> to vector<16x128xbf16>
    %c0_25 = arith.constant 0 : index
    %c0_26 = arith.constant 0 : index
    %33 = vector.load %arg8[%c0_25, %c0_26] : memref<128x128xbf16, #tpu.memory_space<vmem>>, vector<128x128xbf16>
    %cst_27 = arith.constant dense<0.000000e+00> : vector<16x128xf32>
    %34 = tpu.matmul %32, %33, %cst_27 {dimension_numbers = #tpu.dot_dimension_numbers<[1], [0], [0], [1], [0, 0, 1, 1], [], []>} : vector<16x128xbf16>, vector<128x128xbf16>, vector<16x128xf32> -> vector<16x128xf32>
    %c0_28 = arith.constant 0 : index
    %c0_29 = arith.constant 0 : index
    %35 = vector.load %arg9[%c0_28, %c0_29] : memref<1x128xf32, #tpu.memory_space<vmem>>, vector<1x128xf32>
    %36 = vector.broadcast %35 : vector<1x128xf32> to vector<16x128xf32>
    %37 = arith.addf %34, %36 : vector<16x128xf32>
    %cst_30 = arith.constant 1.000000e-01 : f32
    %38 = vector.broadcast %cst_30 : f32 to vector<16x128xf32>
    %39 = arith.mulf %38, %37 : vector<16x128xf32>
    %40 = arith.maximumf %37, %39 : vector<16x128xf32>
    %41 = arith.truncf %40 : vector<16x128xf32> to vector<16x128xbf16>
    %c0_31 = arith.constant 0 : index
    %c0_32 = arith.constant 0 : index
    %42 = vector.load %arg10[%c0_31, %c0_32] : memref<128x128xbf16, #tpu.memory_space<vmem>>, vector<128x128xbf16>
    %cst_33 = arith.constant dense<0.000000e+00> : vector<16x128xf32>
    %43 = tpu.matmul %41, %42, %cst_33 {dimension_numbers = #tpu.dot_dimension_numbers<[1], [0], [0], [1], [0, 0, 1, 1], [], []>} : vector<16x128xbf16>, vector<128x128xbf16>, vector<16x128xf32> -> vector<16x128xf32>
    %c0_34 = arith.constant 0 : index
    %c0_35 = arith.constant 0 : index
    %44 = vector.load %arg11[%c0_34, %c0_35] : memref<1x128xf32, #tpu.memory_space<vmem>>, vector<1x128xf32>
    %45 = vector.broadcast %44 : vector<1x128xf32> to vector<16x128xf32>
    %46 = arith.addf %43, %45 : vector<16x128xf32>
    %47 = arith.truncf %46 : vector<16x128xf32> to vector<16x128xbf16>
    %c0_36 = arith.constant 0 : index
    %c0_37 = arith.constant 0 : index
    %48 = vector.load %arg12[%c0_36, %c0_37] : memref<16x128xbf16, #tpu.memory_space<vmem>>, vector<16x128xbf16>
    tpu.vector_store %arg12[%c0_36, %c0_37], %47 {strides = array<i32>} : memref<16x128xbf16, #tpu.memory_space<vmem>>, vector<16x128xbf16>,
    return
  }
  func.func @transform_0(%arg0: i32) -> (i32, i32) {
    %c0_i32 = arith.constant 0 : i32
    %c0_i32_0 = arith.constant 0 : i32
    return %arg0, %c0_i32 : i32, i32
  }
  func.func @transform_1(%arg0: i32) -> (i32, i32) {
    %c0_i32 = arith.constant 0 : i32
    %c0_i32_0 = arith.constant 0 : i32
    %c0_i32_1 = arith.constant 0 : i32
    return %c0_i32, %c0_i32_0 : i32, i32
  }
  func.func @transform_2(%arg0: i32) -> (i32, i32) {
    %c0_i32 = arith.constant 0 : i32
    %c0_i32_0 = arith.constant 0 : i32
    %c0_i32_1 = arith.constant 0 : i32
    return %c0_i32, %c0_i32_0 : i32, i32
  }
  func.func @transform_3(%arg0: i32) -> (i32, i32) {
    %c0_i32 = arith.constant 0 : i32
    %c0_i32_0 = arith.constant 0 : i32
    %c0_i32_1 = arith.constant 0 : i32
    return %c0_i32, %c0_i32_0 : i32, i32
  }
  func.func @transform_4(%arg0: i32) -> (i32, i32) {
    %c0_i32 = arith.constant 0 : i32
    %c0_i32_0 = arith.constant 0 : i32
    %c0_i32_1 = arith.constant 0 : i32
    return %c0_i32, %c0_i32_0 : i32, i32
  }
  func.func @transform_5(%arg0: i32) -> (i32, i32) {
    %c0_i32 = arith.constant 0 : i32
    %c0_i32_0 = arith.constant 0 : i32
    %c0_i32_1 = arith.constant 0 : i32
    return %c0_i32, %c0_i32_0 : i32, i32
  }
  func.func @transform_6(%arg0: i32) -> (i32, i32) {
    %c0_i32 = arith.constant 0 : i32
    %c0_i32_0 = arith.constant 0 : i32
    %c0_i32_1 = arith.constant 0 : i32
    return %c0_i32, %c0_i32_0 : i32, i32
  }
  func.func @transform_7(%arg0: i32) -> (i32, i32) {
    %c0_i32 = arith.constant 0 : i32
    %c0_i32_0 = arith.constant 0 : i32
    %c0_i32_1 = arith.constant 0 : i32
    return %c0_i32, %c0_i32_0 : i32, i32
  }
  func.func @transform_8(%arg0: i32) -> (i32, i32) {
    %c0_i32 = arith.constant 0 : i32
    %c0_i32_0 = arith.constant 0 : i32
    %c0_i32_1 = arith.constant 0 : i32
    return %c0_i32, %c0_i32_0 : i32, i32
  }
  func.func @transform_9(%arg0: i32) -> (i32, i32) {
    %c0_i32 = arith.constant 0 : i32
    %c0_i32_0 = arith.constant 0 : i32
    %c0_i32_1 = arith.constant 0 : i32
    return %c0_i32, %c0_i32_0 : i32, i32
  }
  func.func @transform_10(%arg0: i32) -> (i32, i32) {
    %c0_i32 = arith.constant 0 : i32
    %c0_i32_0 = arith.constant 0 : i32
    %c0_i32_1 = arith.constant 0 : i32
    return %c0_i32, %c0_i32_0 : i32, i32
  }
  func.func @transform_11(%arg0: i32) -> (i32, i32) {
    %c0_i32 = arith.constant 0 : i32
    %c0_i32_0 = arith.constant 0 : i32
    return %arg0, %c0_i32 : i32, i32
  }
}

</mosaic_0001>

<llo_original>
// kernel: soccer_outcome_classifier.1
$region0: #{soccer_outcome_classifier.1}
  #allocation0 [shape = 'u32[]', space=smem, size = 0x4, offset = 0x4, fixed_abs, tag = 'smem constant byte address 0x4 - core index']
  #allocation1 [shape = 'u32[144,128]{1,0:T(1,128)}', space=vmem, size = 0x12000, scoped, tag = 'internal scratch']
  #allocation2 [shape = 'f32[16,128]{1,0:T(8,128)}', space=vmem, size = 0x2000, scoped, tag = 'scratch operand']
  %s0 = inlined_call_operand.vmem [shape: f32[16,20], index: 0, kind: input, shape index: {}]
  %s1 = inlined_call_operand.hbm [shape: bf16[128,256], index: 1, kind: input, shape index: {}]
  %s2 = inlined_call_operand.vmem [shape: f32[1,256], index: 2, kind: input, shape index: {}]
  %s3 = inlined_call_operand.hbm [shape: bf16[256,128], index: 3, kind: input, shape index: {}]
  %s4 = inlined_call_operand.vmem [shape: f32[1,128], index: 4, kind: input, shape index: {}]
  %s5 = inlined_call_operand.hbm [shape: bf16[128,128], index: 5, kind: input, shape index: {}]
  %s6 = inlined_call_operand.vmem [shape: f32[1,128], index: 6, kind: input, shape index: {}]
  %s7 = inlined_call_operand.hbm [shape: bf16[128,128], index: 7, kind: input, shape index: {}]
  %s8 = inlined_call_operand.vmem [shape: f32[1,128], index: 8, kind: input, shape index: {}]
  %s9 = inlined_call_operand.hbm [shape: bf16[128,128], index: 9, kind: input, shape index: {}]
  %s10 = inlined_call_operand.vmem [shape: f32[1,128], index: 10, kind: input, shape index: {}]
  %s11 = inlined_call_operand.vmem [shape: bf16[16,128], index: 11, kind: output, shape index: {}]
  %s12 = sld [smem:[#allocation0]]
  $region74: #{soccer_outcome_classifier.1} parent=0
    _
  %s14 = ssub.s32 1, %s12
  %s15 = scalar_select 0, %s14, %s12
  $region1: #{soccer_outcome_classifier.1} parent=0
    #allocation3 [shape = 'u8[65536]{0}', space=vmem, size = 0x10000, scoped, tag = 'input window, operand 1, single buffered']
    #allocation4 [shape = 's32[1]{0}', space=sflag, size = 0x4, scoped, tag = 'scoped memory for soccer_outcome_classifier.1']
    #allocation5 [shape = 'u8[65536]{0}', space=vmem, size = 0x10000, scoped, tag = 'input window, operand 3, single buffered']
    #allocation6 [shape = 's32[1]{0}', space=sflag, size = 0x4, scoped, tag = 'scoped memory for soccer_outcome_classifier.1']
    #allocation7 [shape = 'u8[32768]{0}', space=vmem, size = 0x8000, scoped, tag = 'input window, operand 5, single buffered']
    #allocation8 [shape = 'u8[32768]{0}', space=vmem, size = 0x8000, scoped, tag = 'input window, operand 7, single buffered']
    #allocation9 [shape = 's32[1]{0}', space=sflag, size = 0x4, scoped, tag = 'scoped memory for soccer_outcome_classifier.1']
    #allocation10 [shape = 'u8[32768]{0}', space=vmem, size = 0x8000, scoped, tag = 'input window, operand 9, single buffered']
    %16 = vsyncpa [#allocation4], 0
    %17 = vsyncpa [#allocation6], 0
    %18 = vsyncpa [#allocation9], 0
    // Predicated region
    $region2: #{soccer_outcome_classifier.1} parent=1 // pred_check
      _
    $region3: #{soccer_outcome_classifier.1} parent=1 // pred_check_branch
      %20 = sbr.rel (0) target = $region5
    $region4: #{soccer_outcome_classifier.1} parent=1 // pred_region
      _
    $region5: #{soccer_outcome_classifier.1} parent=1 // pred_fallthru
      _
    // Predicated region
    $region6: #{soccer_outcome_classifier.1} parent=1 // pred_check
      _
    $region7: #{soccer_outcome_classifier.1} parent=1 // pred_check_branch
      %22 = sbr.rel (0) target = $region9
    $region8: #{soccer_outcome_classifier.1} parent=1 // pred_region
      %s24 = ssub.s32 2048, 2048
      %25 = vsyncadd [#allocation4], %s24
      %s26 = sshll.u32 [#allocation3], 4
      %s27 = int_to_ptr.vmem [resolvable:$true] %s26
      %32 = dma.hbm_to_vmem [thread:$0]  %s1, 2048, %s27, [#allocation4], 128, 128, 8
    $region9: #{soccer_outcome_classifier.1} parent=1 // pred_fallthru
      _
    // Predicated region
    $region10: #{soccer_outcome_classifier.1} parent=1 // pred_check
      _
    $region11: #{soccer_outcome_classifier.1} parent=1 // pred_check_branch
      %34 = sbr.rel (0) target = $region13
    $region12: #{soccer_outcome_classifier.1} parent=1 // pred_region
      _
    $region13: #{soccer_outcome_classifier.1} parent=1 // pred_fallthru
      _
    // Predicated region
    $region14: #{soccer_outcome_classifier.1} parent=1 // pred_check
      _
    $region15: #{soccer_outcome_classifier.1} parent=1 // pred_check_branch
      %36 = sbr.rel (0) target = $region17
    $region16: #{soccer_outcome_classifier.1} parent=1 // pred_region
      %s38 = ssub.s32 2048, 2048
      %39 = vsyncadd [#allocation6], %s38
      %s40 = sshll.u32 [#allocation5], 4
      %s41 = int_to_ptr.vmem [resolvable:$true] %s40
      %46 = dma.hbm_to_vmem [thread:$0]  %s3, 2048, %s41, [#allocation6], 64, 64, 4
    $region17: #{soccer_outcome_classifier.1} parent=1 // pred_fallthru
      _
    // Predicated region
    $region18: #{soccer_outcome_classifier.1} parent=1 // pred_check
      _
    $region19: #{soccer_outcome_classifier.1} parent=1 // pred_check_branch
      %48 = sbr.rel (0) target = $region21
    $region20: #{soccer_outcome_classifier.1} parent=1 // pred_region
      _
    $region21: #{soccer_outcome_classifier.1} parent=1 // pred_fallthru
      _
    // Predicated region
    $region22: #{soccer_outcome_classifier.1} parent=1 // pred_check
      _
    $region23: #{soccer_outcome_classifier.1} parent=1 // pred_check_branch
      %50 = sbr.rel (0) target = $region25
    $region24: #{soccer_outcome_classifier.1} parent=1 // pred_region
      %s52 = ssub.s32 1024, 1024
      %53 = vsyncadd [#allocation6], %s52
      %s54 = sshll.u32 [#allocation7], 4
      %s55 = int_to_ptr.vmem [resolvable:$true] %s54
      %60 = dma.hbm_to_vmem [thread:$0]  %s5, 1024, %s55, [#allocation6], 64, 64, 4
    $region25: #{soccer_outcome_classifier.1} parent=1 // pred_fallthru
      _
    // Predicated region
    $region26: #{soccer_outcome_classifier.1} parent=1 // pred_check
      _
    $region27: #{soccer_outcome_classifier.1} parent=1 // pred_check_branch
      %62 = sbr.rel (0) target = $region29
    $region28: #{soccer_outcome_classifier.1} parent=1 // pred_region
      _
    $region29: #{soccer_outcome_classifier.1} parent=1 // pred_fallthru
      _
    // Predicated region
    $region30: #{soccer_outcome_classifier.1} parent=1 // pred_check
      _
    $region31: #{soccer_outcome_classifier.1} parent=1 // pred_check_branch
      %64 = sbr.rel (0) target = $region33
    $region32: #{soccer_outcome_classifier.1} parent=1 // pred_region
      %s66 = ssub.s32 1024, 1024
      %67 = vsyncadd [#allocation9], %s66
      %s68 = sshll.u32 [#allocation8], 4
      %s69 = int_to_ptr.vmem [resolvable:$true] %s68
      %74 = dma.hbm_to_vmem [thread:$0]  %s7, 1024, %s69, [#allocation9], 64, 64, 4
    $region33: #{soccer_outcome_classifier.1} parent=1 // pred_fallthru
      _
    // Predicated region
    $region34: #{soccer_outcome_classifier.1} parent=1 // pred_check
      _
    $region35: #{soccer_outcome_classifier.1} parent=1 // pred_check_branch
      %76 = sbr.rel (0) target = $region37
    $region36: #{soccer_outcome_classifier.1} parent=1 // pred_region
      _
    $region37: #{soccer_outcome_classifier.1} parent=1 // pred_fallthru
      _
    // Predicated region
    $region38: #{soccer_outcome_classifier.1} parent=1 // pred_check
      _
    $region39: #{soccer_outcome_classifier.1} parent=1 // pred_check_branch
      %78 = sbr.rel (0) target = $region41
    $region40: #{soccer_outcome_classifier.1} parent=1 // pred_region
      %s80 = ssub.s32 1024, 1024
      %81 = vsyncadd [#allocation9], %s80
      %s82 = sshll.u32 [#allocation10], 4
      %s83 = int_to_ptr.vmem [resolvable:$true] %s82
      %88 = dma.hbm_to_vmem [thread:$0]  %s9, 1024, %s83, [#allocation9], 64, 64, 4
    $region41: #{soccer_outcome_classifier.1} parent=1 // pred_fallthru
      _
    // Predicated region
    $region42: #{soccer_outcome_classifier.1} parent=1 // pred_check
      _
    $region43: #{soccer_outcome_classifier.1} parent=1 // pred_check_branch
      %90 = sbr.rel (0) target = $region45
    $region44: #{soccer_outcome_classifier.1} parent=1 // pred_region
      _
    $region45: #{soccer_outcome_classifier.1} parent=1 // pred_fallthru
      _
    // Predicated region
    $region46: #{soccer_outcome_classifier.1} parent=1 // pred_check
      _
    $region47: #{soccer_outcome_classifier.1} parent=1 // pred_check_branch
      %92 = sbr.rel (0) target = $region49
    $region48: #{soccer_outcome_classifier.1} parent=1 // pred_region
      %93 = dma.done [#allocation4], 2048
    $region49: #{soccer_outcome_classifier.1} parent=1 // pred_fallthru
      _
    // Predicated region
    $region50: #{soccer_outcome_classifier.1} parent=1 // pred_check
      _
    $region51: #{soccer_outcome_classifier.1} parent=1 // pred_check_branch
      %95 = sbr.rel (0) target = $region53
    $region52: #{soccer_outcome_classifier.1} parent=1 // pred_region
      %96 = dma.done [#allocation6], 2048
    $region53: #{soccer_outcome_classifier.1} parent=1 // pred_fallthru
      _
    // Predicated region
    $region54: #{soccer_outcome_classifier.1} parent=1 // pred_check
      _
    $region55: #{soccer_outcome_classifier.1} parent=1 // pred_check_branch
      %98 = sbr.rel (0) target = $region57
    $region56: #{soccer_outcome_classifier.1} parent=1 // pred_region
      %99 = dma.done [#allocation6], 1024
    $region57: #{soccer_outcome_classifier.1} parent=1 // pred_fallthru
      _
    // Predicated region
    $region58: #{soccer_outcome_classifier.1} parent=1 // pred_check
      _
    $region59: #{soccer_outcome_classifier.1} parent=1 // pred_check_branch
      %101 = sbr.rel (0) target = $region61
    $region60: #{soccer_outcome_classifier.1} parent=1 // pred_region
      %102 = dma.done [#allocation9], 1024
    $region61: #{soccer_outcome_classifier.1} parent=1 // pred_fallthru
      _
    // Predicated region
    $region62: #{soccer_outcome_classifier.1} parent=1 // pred_check
      _
    $region63: #{soccer_outcome_classifier.1} parent=1 // pred_check_branch
      %104 = sbr.rel (0) target = $region65
    $region64: #{soccer_outcome_classifier.1} parent=1 // pred_region
      %105 = dma.done [#allocation9], 1024
    $region65: #{soccer_outcome_classifier.1} parent=1 // pred_fallthru
      _
    %107 = vst [vmem:[#allocation2] sm:$0xff] 0.0
    %108 = vst [vmem:[#allocation2 + $0x8] sm:$0xff] 0.0
    %v109 = vld [vmem:[%s0] sm:$0xff]
    %v110 = vld [vmem:[%s0 + $0x8] sm:$0xff]
    %vm111 = vcmask 162816
    %112 = vst.msk [vmem:[#allocation2] sm:$0xff] %vm111, %v109
    %113 = vst.msk [vmem:[#allocation2 + $0x8] sm:$0xff] %vm111, %v110
    %v114 = vld [vmem:[#allocation2] sm:$0xff]
    %v115 = vld [vmem:[#allocation2 + $0x8] sm:$0xff]
    %v116 = vpack.c.bf16 %v115, %v114
    %v117 = vld [vmem:[#allocation3] sm:$0xff]
    %v118 = vld [vmem:[#allocation3 + $0x8] sm:$0xff]
    %v119 = vld [vmem:[#allocation3 + $0x10] sm:$0xff]
    %v120 = vld [vmem:[#allocation3 + $0x18] sm:$0xff]
    %v121 = vld [vmem:[#allocation3 + $0x20] sm:$0xff]
    %v122 = vld [vmem:[#allocation3 + $0x28] sm:$0xff]
    %v123 = vld [vmem:[#allocation3 + $0x30] sm:$0xff]
    %v124 = vld [vmem:[#allocation3 + $0x38] sm:$0xff]
    %v125 = vld [vmem:[#allocation3 + $0x40] sm:$0xff]
    %v126 = vld [vmem:[#allocation3 + $0x48] sm:$0xff]
    %v127 = vld [vmem:[#allocation3 + $0x50] sm:$0xff]
    %v128 = vld [vmem:[#allocation3 + $0x58] sm:$0xff]
    %v129 = vld [vmem:[#allocation3 + $0x60] sm:$0xff]
    %v130 = vld [vmem:[#allocation3 + $0x68] sm:$0xff]
    %v131 = vld [vmem:[#allocation3 + $0x70] sm:$0xff]
    %v132 = vld [vmem:[#allocation3 + $0x78] sm:$0xff]
    %v133 = vld [vmem:[%s2] sm:$0x3]
    %v135 = vlaneseq
    %v136 = vshrl.u32 %v135, 7
    %v137 = vsub.s32 0, %v136
    %v138 = vrot.slane %v133, %v137
    %v139 = vlaneseq
    %v140 = vshrl.u32 %v139, 7
    %v141 = vsub.s32 1, %v140
    %v142 = vrot.slane %v133, %v141
    %v161 = vunpack.c.l.b16 %v117
    %v162 = vunpack.c.h.b16 %v117
    %v163 = vunpack.c.l.b16 %v118
    %v164 = vunpack.c.h.b16 %v118
    %v165 = vunpack.c.l.b16 %v119
    %v166 = vunpack.c.h.b16 %v119
    %v167 = vunpack.c.l.b16 %v120
    %v168 = vunpack.c.h.b16 %v120
    %v169 = vunpack.c.l.b16 %v121
    %v170 = vunpack.c.h.b16 %v121
    %v171 = vunpack.c.l.b16 %v122
    %v172 = vunpack.c.h.b16 %v122
    %v173 = vunpack.c.l.b16 %v123
    %v174 = vunpack.c.h.b16 %v123
    %v175 = vunpack.c.l.b16 %v124
    %v176 = vunpack.c.h.b16 %v124
    %v177 = vunpack.c.l.b16 %v125
    %v178 = vunpack.c.h.b16 %v125
    %v179 = vunpack.c.l.b16 %v126
    %v180 = vunpack.c.h.b16 %v126
    %v181 = vunpack.c.l.b16 %v127
    %v182 = vunpack.c.h.b16 %v127
    %v183 = vunpack.c.l.b16 %v128
    %v184 = vunpack.c.h.b16 %v128
    %v185 = vunpack.c.l.b16 %v129
    %v186 = vunpack.c.h.b16 %v129
    %v187 = vunpack.c.l.b16 %v130
    %v188 = vunpack.c.h.b16 %v130
    %v189 = vunpack.c.l.b16 %v131
    %v190 = vunpack.c.h.b16 %v131
    %v191 = vunpack.c.l.b16 %v132
    %v192 = vunpack.c.h.b16 %v132
    %v193 = vpack.c.b16 %v163, %v161
    %v194 = vpack.c.b16 %v164, %v162
    %v195 = vpack.c.b16 %v167, %v165
    %v196 = vpack.c.b16 %v168, %v166
    %v197 = vpack.c.b16 %v171, %v169
    %v198 = vpack.c.b16 %v172, %v170
    %v199 = vpack.c.b16 %v175, %v173
    %v200 = vpack.c.b16 %v176, %v174
    %v201 = vpack.c.b16 %v179, %v177
    %v202 = vpack.c.b16 %v180, %v178
    %v203 = vpack.c.b16 %v183, %v181
    %v204 = vpack.c.b16 %v184, %v182
    %v205 = vpack.c.b16 %v187, %v185
    %v206 = vpack.c.b16 %v188, %v186
    %v207 = vpack.c.b16 %v191, %v189
    %v208 = vpack.c.b16 %v192, %v190
    %225 = vmatprep.subr.bf16.mxu0 %v194
    %226 = vmatpush1.bf16.msra.mxu0 %v193
    %227 = vmatprep.subr.bf16.mxu0 %v196
    %228 = vmatpush1.bf16.msra.mxu0 %v195
    %229 = vmatprep.subr.bf16.mxu0 %v198
    %230 = vmatpush1.bf16.msra.mxu0 %v197
    %231 = vmatprep.subr.bf16.mxu0 %v200
    %232 = vmatpush1.bf16.msra.mxu0 %v199
    %233 = vmatprep.subr.bf16.mxu0 %v202
    %234 = vmatpush1.bf16.msra.mxu0 %v201
    %235 = vmatprep.subr.bf16.mxu0 %v204
    %236 = vmatpush1.bf16.msra.mxu0 %v203
    %237 = vmatprep.subr.bf16.mxu0 %v206
    %238 = vmatpush1.bf16.msra.mxu0 %v205
    %239 = vmatprep.subr.bf16.mxu0 %v208
    %240 = vmatpush1.bf16.msra.mxu0 %v207
    %241 = vmatprep.subr.bf16.mxu0 0
    %242 = vmatpush1.bf16.msra.mxu0 0
    %243 = vmatprep.subr.bf16.mxu0 0
    %244 = vmatpush1.bf16.msra.mxu0 0
    %245 = vmatprep.subr.bf16.mxu0 0
    %246 = vmatpush1.bf16.msra.mxu0 0
    %247 = vmatprep.subr.bf16.mxu0 0
    %248 = vmatpush1.bf16.msra.mxu0 0
    %249 = vmatprep.subr.bf16.mxu0 0
    %250 = vmatpush1.bf16.msra.mxu0 0
    %251 = vmatprep.subr.bf16.mxu0 0
    %252 = vmatpush1.bf16.msra.mxu0 0
    %253 = vmatprep.subr.bf16.mxu0 0
    %254 = vmatpush1.bf16.msra.mxu0 0
    %255 = vmatprep.subr.bf16.mxu0 0
    %256 = vmatpush1.bf16.msra.mxu0 0
    %257 = vmatprep.mubr.bf16.mxu0 0
    %258 = vmatmul.mubr.bf16.gmra.mrb[0].mxu0 %v116
    %v259 = vpop.f32.mrb[0].mxu0
    %v260 = vadd.f32 %v138, %v259
    %v261 = vpop.f32.mrb[0].mxu0
    %v262 = vadd.f32 %v142, %v261
    %v263 = vpop.f32.mrb[0].mxu0
    %v264 = vadd.f32 %v138, %v263
    %v265 = vpop.f32.mrb[0].mxu0
    %v266 = vadd.f32 %v142, %v265
    %267 = vdwg.mxu0
    %v268 = vmul.f32 %v260, 0.1
    %v269 = vmul.f32 %v262, 0.1
    %v270 = vmul.f32 %v264, 0.1
    %v271 = vmul.f32 %v266, 0.1
    %v272 = vmax.f32 %v260, %v268
    %v273 = vmax.f32 %v262, %v269
    %v274 = vmax.f32 %v264, %v270
    %v275 = vmax.f32 %v266, %v271
    %v276 = vpack.c.bf16 %v274, %v272
    %v277 = vpack.c.bf16 %v275, %v273
    %v278 = vld [vmem:[#allocation5] sm:$0xf]
    %v279 = vld [vmem:[#allocation5 + $0x4] sm:$0xf]
    %v280 = vld [vmem:[#allocation5 + $0x8] sm:$0xf]
    %v281 = vld [vmem:[#allocation5 + $0xc] sm:$0xf]
    %v282 = vld [vmem:[#allocation5 + $0x10] sm:$0xf]
    %v283 = vld [vmem:[#allocation5 + $0x14] sm:$0xf]
    %v284 = vld [vmem:[#allocation5 + $0x18] sm:$0xf]
    %v285 = vld [vmem:[#allocation5 + $0x1c] sm:$0xf]
    %v286 = vld [vmem:[#allocation5 + $0x20] sm:$0xf]
    %v287 = vld [vmem:[#allocation5 + $0x24] sm:$0xf]
    %v288 = vld [vmem:[#allocation5 + $0x28] sm:$0xf]
    %v289 = vld [vmem:[#allocation5 + $0x2c] sm:$0xf]
    %v290 = vld [vmem:[#allocation5 + $0x30] sm:$0xf]
    %v291 = vld [vmem:[#allocation5 + $0x34] sm:$0xf]
    %v292 = vld [vmem:[#allocation5 + $0x38] sm:$0xf]
    %v293 = vld [vmem:[#allocation5 + $0x3c] sm:$0xf]
    %v294 = vld [vmem:[#allocation5 + $0x40] sm:$0xf]
    %v295 = vld [vmem:[#allocation5 + $0x44] sm:$0xf]
    %v296 = vld [vmem:[#allocation5 + $0x48] sm:$0xf]
    %v297 = vld [vmem:[#allocation5 + $0x4c] sm:$0xf]
    %v298 = vld [vmem:[#allocation5 + $0x50] sm:$0xf]
    %v299 = vld [vmem:[#allocation5 + $0x54] sm:$0xf]
    %v300 = vld [vmem:[#allocation5 + $0x58] sm:$0xf]
    %v301 = vld [vmem:[#allocation5 + $0x5c] sm:$0xf]
    %v302 = vld [vmem:[#allocation5 + $0x60] sm:$0xf]
    %v303 = vld [vmem:[#allocation5 + $0x64] sm:$0xf]
    %v304 = vld [vmem:[#allocation5 + $0x68] sm:$0xf]
    %v305 = vld [vmem:[#allocation5 + $0x6c] sm:$0xf]
    %v306 = vld [vmem:[#allocation5 + $0x70] sm:$0xf]
    %v307 = vld [vmem:[#allocation5 + $0x74] sm:$0xf]
    %v308 = vld [vmem:[#allocation5 + $0x78] sm:$0xf]
    %v309 = vld [vmem:[#allocation5 + $0x7c] sm:$0xf]
    %v310 = vld [vmem:[%s4] sm:$0x1]
    %v312 = vlaneseq
    %v313 = vshrl.u32 %v312, 7
    %v314 = vsub.s32 0, %v313
    %v315 = vrot.slane %v310, %v314
    %v349 = vunpack.c.l.b16 %v278
    %v350 = vunpack.c.l.b16 %v279
    %v351 = vunpack.c.l.b16 %v280
    %v352 = vunpack.c.l.b16 %v281
    %v353 = vunpack.c.l.b16 %v282
    %v354 = vunpack.c.l.b16 %v283
    %v355 = vunpack.c.l.b16 %v284
    %v356 = vunpack.c.l.b16 %v285
    %v357 = vunpack.c.l.b16 %v286
    %v358 = vunpack.c.l.b16 %v287
    %v359 = vunpack.c.l.b16 %v288
    %v360 = vunpack.c.l.b16 %v289
    %v361 = vunpack.c.l.b16 %v290
    %v362 = vunpack.c.l.b16 %v291
    %v363 = vunpack.c.l.b16 %v292
    %v364 = vunpack.c.l.b16 %v293
    %v365 = vunpack.c.l.b16 %v294
    %v366 = vunpack.c.l.b16 %v295
    %v367 = vunpack.c.l.b16 %v296
    %v368 = vunpack.c.l.b16 %v297
    %v369 = vunpack.c.l.b16 %v298
    %v370 = vunpack.c.l.b16 %v299
    %v371 = vunpack.c.l.b16 %v300
    %v372 = vunpack.c.l.b16 %v301
    %v373 = vunpack.c.l.b16 %v302
    %v374 = vunpack.c.l.b16 %v303
    %v375 = vunpack.c.l.b16 %v304
    %v376 = vunpack.c.l.b16 %v305
    %v377 = vunpack.c.l.b16 %v306
    %v378 = vunpack.c.l.b16 %v307
    %v379 = vunpack.c.l.b16 %v308
    %v380 = vunpack.c.l.b16 %v309
    %v381 = vpack.c.b16 %v350, %v349
    %v382 = vpack.c.b16 %v352, %v351
    %v383 = vpack.c.b16 %v354, %v353
    %v384 = vpack.c.b16 %v356, %v355
    %v385 = vpack.c.b16 %v358, %v357
    %v386 = vpack.c.b16 %v360, %v359
    %v387 = vpack.c.b16 %v362, %v361
    %v388 = vpack.c.b16 %v364, %v363
    %v389 = vpack.c.b16 %v366, %v365
    %v390 = vpack.c.b16 %v368, %v367
    %v391 = vpack.c.b16 %v370, %v369
    %v392 = vpack.c.b16 %v372, %v371
    %v393 = vpack.c.b16 %v374, %v373
    %v394 = vpack.c.b16 %v376, %v375
    %v395 = vpack.c.b16 %v378, %v377
    %v396 = vpack.c.b16 %v380, %v379
    %413 = vmatprep.subr.bf16.mxu0 0
    %414 = vmatpush1.bf16.msra.mxu0 %v381
    %415 = vmatprep.subr.bf16.mxu0 0
    %416 = vmatpush1.bf16.msra.mxu0 %v382
    %417 = vmatprep.subr.bf16.mxu0 0
    %418 = vmatpush1.bf16.msra.mxu0 %v383
    %419 = vmatprep.subr.bf16.mxu0 0
    %420 = vmatpush1.bf16.msra.mxu0 %v384
    %421 = vmatprep.subr.bf16.mxu0 0
    %422 = vmatpush1.bf16.msra.mxu0 %v385
    %423 = vmatprep.subr.bf16.mxu0 0
    %424 = vmatpush1.bf16.msra.mxu0 %v386
    %425 = vmatprep.subr.bf16.mxu0 0
    %426 = vmatpush1.bf16.msra.mxu0 %v387
    %427 = vmatprep.subr.bf16.mxu0 0
    %428 = vmatpush1.bf16.msra.mxu0 %v388
    %429 = vmatprep.subr.bf16.mxu0 0
    %430 = vmatpush1.bf16.msra.mxu0 %v389
    %431 = vmatprep.subr.bf16.mxu0 0
    %432 = vmatpush1.bf16.msra.mxu0 %v390
    %433 = vmatprep.subr.bf16.mxu0 0
    %434 = vmatpush1.bf16.msra.mxu0 %v391
    %435 = vmatprep.subr.bf16.mxu0 0
    %436 = vmatpush1.bf16.msra.mxu0 %v392
    %437 = vmatprep.subr.bf16.mxu0 0
    %438 = vmatpush1.bf16.msra.mxu0 %v393
    %439 = vmatprep.subr.bf16.mxu0 0
    %440 = vmatpush1.bf16.msra.mxu0 %v394
    %441 = vmatprep.subr.bf16.mxu0 0
    %442 = vmatpush1.bf16.msra.mxu0 %v395
    %443 = vmatprep.subr.bf16.mxu0 0
    %444 = vmatpush1.bf16.msra.mxu0 %v396
    %445 = vmatprep.mubr.bf16.mxu0 %v277
    %446 = vmatmul.mubr.bf16.gmra.mrb[0].mxu0 %v276
    %v447 = vpop.f32.mrb[0].mxu0
    %v448 = vadd.f32 %v315, %v447
    %v449 = vpop.f32.mrb[0].mxu0
    %v450 = vpop.f32.mrb[0].mxu0
    %v451 = vadd.f32 %v315, %v450
    %v452 = vpop.f32.mrb[0].mxu0
    %453 = vdwg.mxu0
    %v454 = vmul.f32 %v448, 0.1
    %v455 = vmul.f32 %v451, 0.1
    %v456 = vmax.f32 %v448, %v454
    %v457 = vmax.f32 %v451, %v455
    %v458 = vpack.c.bf16 %v457, %v456
    %v459 = vld [vmem:[#allocation7] sm:$0xf]
    %v460 = vld [vmem:[#allocation7 + $0x4] sm:$0xf]
    %v461 = vld [vmem:[#allocation7 + $0x8] sm:$0xf]
    %v462 = vld [vmem:[#allocation7 + $0xc] sm:$0xf]
    %v463 = vld [vmem:[#allocation7 + $0x10] sm:$0xf]
    %v464 = vld [vmem:[#allocation7 + $0x14] sm:$0xf]
    %v465 = vld [vmem:[#allocation7 + $0x18] sm:$0xf]
    %v466 = vld [vmem:[#allocation7 + $0x1c] sm:$0xf]
    %v467 = vld [vmem:[#allocation7 + $0x20] sm:$0xf]
    %v468 = vld [vmem:[#allocation7 + $0x24] sm:$0xf]
    %v469 = vld [vmem:[#allocation7 + $0x28] sm:$0xf]
    %v470 = vld [vmem:[#allocation7 + $0x2c] sm:$0xf]
    %v471 = vld [vmem:[#allocation7 + $0x30] sm:$0xf]
    %v472 = vld [vmem:[#allocation7 + $0x34] sm:$0xf]
    %v473 = vld [vmem:[#allocation7 + $0x38] sm:$0xf]
    %v474 = vld [vmem:[#allocation7 + $0x3c] sm:$0xf]
    %v475 = vld [vmem:[%s6] sm:$0x1]
    %v477 = vlaneseq
    %v478 = vshrl.u32 %v477, 7
    %v479 = vsub.s32 0, %v478
    %v480 = vrot.slane %v475, %v479
    %v498 = vunpack.c.l.b16 %v459
    %v499 = vunpack.c.l.b16 %v460
    %v500 = vunpack.c.l.b16 %v461
    %v501 = vunpack.c.l.b16 %v462
    %v502 = vunpack.c.l.b16 %v463
    %v503 = vunpack.c.l.b16 %v464
    %v504 = vunpack.c.l.b16 %v465
    %v505 = vunpack.c.l.b16 %v466
    %v506 = vunpack.c.l.b16 %v467
    %v507 = vunpack.c.l.b16 %v468
    %v508 = vunpack.c.l.b16 %v469
    %v509 = vunpack.c.l.b16 %v470
    %v510 = vunpack.c.l.b16 %v471
    %v511 = vunpack.c.l.b16 %v472
    %v512 = vunpack.c.l.b16 %v473
    %v513 = vunpack.c.l.b16 %v474
    %v514 = vpack.c.b16 %v499, %v498
    %v515 = vpack.c.b16 %v501, %v500
    %v516 = vpack.c.b16 %v503, %v502
    %v517 = vpack.c.b16 %v505, %v504
    %v518 = vpack.c.b16 %v507, %v506
    %v519 = vpack.c.b16 %v509, %v508
    %v520 = vpack.c.b16 %v511, %v510
    %v521 = vpack.c.b16 %v513, %v512
    %530 = vmatprep.subr.bf16.mxu0 0
    %531 = vmatpush1.bf16.msra.mxu0 %v514
    %532 = vmatprep.subr.bf16.mxu0 0
    %533 = vmatpush1.bf16.msra.mxu0 %v515
    %534 = vmatprep.subr.bf16.mxu0 0
    %535 = vmatpush1.bf16.msra.mxu0 %v516
    %536 = vmatprep.subr.bf16.mxu0 0
    %537 = vmatpush1.bf16.msra.mxu0 %v517
    %538 = vmatprep.subr.bf16.mxu0 0
    %539 = vmatpush1.bf16.msra.mxu0 %v518
    %540 = vmatprep.subr.bf16.mxu0 0
    %541 = vmatpush1.bf16.msra.mxu0 %v519
    %542 = vmatprep.subr.bf16.mxu0 0
    %543 = vmatpush1.bf16.msra.mxu0 %v520
    %544 = vmatprep.subr.bf16.mxu0 0
    %545 = vmatpush1.bf16.msra.mxu0 %v521
    %546 = vmatprep.subr.bf16.mxu0 0
    %547 = vmatpush1.bf16.msra.mxu0 0
    %548 = vmatprep.subr.bf16.mxu0 0
    %549 = vmatpush1.bf16.msra.mxu0 0
    %550 = vmatprep.subr.bf16.mxu0 0
    %551 = vmatpush1.bf16.msra.mxu0 0
    %552 = vmatprep.subr.bf16.mxu0 0
    %553 = vmatpush1.bf16.msra.mxu0 0
    %554 = vmatprep.subr.bf16.mxu0 0
    %555 = vmatpush1.bf16.msra.mxu0 0
    %556 = vmatprep.subr.bf16.mxu0 0
    %557 = vmatpush1.bf16.msra.mxu0 0
    %558 = vmatprep.subr.bf16.mxu0 0
    %559 = vmatpush1.bf16.msra.mxu0 0
    %560 = vmatprep.subr.bf16.mxu0 0
    %561 = vmatpush1.bf16.msra.mxu0 0
    %562 = vmatprep.mubr.bf16.mxu0 0
    %563 = vmatmul.mubr.bf16.gmra.mrb[0].mxu0 %v458
    %v564 = vpop.f32.mrb[0].mxu0
    %v565 = vadd.f32 %v480, %v564
    %v566 = vpop.f32.mrb[0].mxu0
    %v567 = vpop.f32.mrb[0].mxu0
    %v568 = vadd.f32 %v480, %v567
    %v569 = vpop.f32.mrb[0].mxu0
    %570 = vdwg.mxu0
    %v571 = vmul.f32 %v565, 0.1
    %v572 = vmul.f32 %v568, 0.1
    %v573 = vmax.f32 %v565, %v571
    %v574 = vmax.f32 %v568, %v572
    %v575 = vpack.c.bf16 %v574, %v573
    %v576 = vld [vmem:[#allocation8] sm:$0xf]
    %v577 = vld [vmem:[#allocation8 + $0x4] sm:$0xf]
    %v578 = vld [vmem:[#allocation8 + $0x8] sm:$0xf]
    %v579 = vld [vmem:[#allocation8 + $0xc] sm:$0xf]
    %v580 = vld [vmem:[#allocation8 + $0x10] sm:$0xf]
    %v581 = vld [vmem:[#allocation8 + $0x14] sm:$0xf]
    %v582 = vld [vmem:[#allocation8 + $0x18] sm:$0xf]
    %v583 = vld [vmem:[#allocation8 + $0x1c] sm:$0xf]
    %v584 = vld [vmem:[#allocation8 + $0x20] sm:$0xf]
    %v585 = vld [vmem:[#allocation8 + $0x24] sm:$0xf]
    %v586 = vld [vmem:[#allocation8 + $0x28] sm:$0xf]
    %v587 = vld [vmem:[#allocation8 + $0x2c] sm:$0xf]
    %v588 = vld [vmem:[#allocation8 + $0x30] sm:$0xf]
    %v589 = vld [vmem:[#allocation8 + $0x34] sm:$0xf]
    %v590 = vld [vmem:[#allocation8 + $0x38] sm:$0xf]
    %v591 = vld [vmem:[#allocation8 + $0x3c] sm:$0xf]
    %v592 = vld [vmem:[%s8] sm:$0x1]
    %v594 = vlaneseq
    %v595 = vshrl.u32 %v594, 7
    %v596 = vsub.s32 0, %v595
    %v597 = vrot.slane %v592, %v596
    %v615 = vunpack.c.l.b16 %v576
    %v616 = vunpack.c.l.b16 %v577
    %v617 = vunpack.c.l.b16 %v578
    %v618 = vunpack.c.l.b16 %v579
    %v619 = vunpack.c.l.b16 %v580
    %v620 = vunpack.c.l.b16 %v581
    %v621 = vunpack.c.l.b16 %v582
    %v622 = vunpack.c.l.b16 %v583
    %v623 = vunpack.c.l.b16 %v584
    %v624 = vunpack.c.l.b16 %v585
    %v625 = vunpack.c.l.b16 %v586
    %v626 = vunpack.c.l.b16 %v587
    %v627 = vunpack.c.l.b16 %v588
    %v628 = vunpack.c.l.b16 %v589
    %v629 = vunpack.c.l.b16 %v590
    %v630 = vunpack.c.l.b16 %v591
    %v631 = vpack.c.b16 %v616, %v615
    %v632 = vpack.c.b16 %v618, %v617
    %v633 = vpack.c.b16 %v620, %v619
    %v634 = vpack.c.b16 %v622, %v621
    %v635 = vpack.c.b16 %v624, %v623
    %v636 = vpack.c.b16 %v626, %v625
    %v637 = vpack.c.b16 %v628, %v627
    %v638 = vpack.c.b16 %v630, %v629
    %647 = vmatprep.subr.bf16.mxu0 0
    %648 = vmatpush1.bf16.msra.mxu0 %v631
    %649 = vmatprep.subr.bf16.mxu0 0
    %650 = vmatpush1.bf16.msra.mxu0 %v632
    %651 = vmatprep.subr.bf16.mxu0 0
    %652 = vmatpush1.bf16.msra.mxu0 %v633
    %653 = vmatprep.subr.bf16.mxu0 0
    %654 = vmatpush1.bf16.msra.mxu0 %v634
    %655 = vmatprep.subr.bf16.mxu0 0
    %656 = vmatpush1.bf16.msra.mxu0 %v635
    %657 = vmatprep.subr.bf16.mxu0 0
    %658 = vmatpush1.bf16.msra.mxu0 %v636
    %659 = vmatprep.subr.bf16.mxu0 0
    %660 = vmatpush1.bf16.msra.mxu0 %v637
    %661 = vmatprep.subr.bf16.mxu0 0
    %662 = vmatpush1.bf16.msra.mxu0 %v638
    %663 = vmatprep.subr.bf16.mxu0 0
    %664 = vmatpush1.bf16.msra.mxu0 0
    %665 = vmatprep.subr.bf16.mxu0 0
    %666 = vmatpush1.bf16.msra.mxu0 0
    %667 = vmatprep.subr.bf16.mxu0 0
    %668 = vmatpush1.bf16.msra.mxu0 0
    %669 = vmatprep.subr.bf16.mxu0 0
    %670 = vmatpush1.bf16.msra.mxu0 0
    %671 = vmatprep.subr.bf16.mxu0 0
    %672 = vmatpush1.bf16.msra.mxu0 0
    %673 = vmatprep.subr.bf16.mxu0 0
    %674 = vmatpush1.bf16.msra.mxu0 0
    %675 = vmatprep.subr.bf16.mxu0 0
    %676 = vmatpush1.bf16.msra.mxu0 0
    %677 = vmatprep.subr.bf16.mxu0 0
    %678 = vmatpush1.bf16.msra.mxu0 0
    %679 = vmatprep.mubr.bf16.mxu0 0
    %680 = vmatmul.mubr.bf16.gmra.mrb[0].mxu0 %v575
    %v681 = vpop.f32.mrb[0].mxu0
    %v682 = vadd.f32 %v597, %v681
    %v683 = vpop.f32.mrb[0].mxu0
    %v684 = vpop.f32.mrb[0].mxu0
    %v685 = vadd.f32 %v597, %v684
    %v686 = vpop.f32.mrb[0].mxu0
    %687 = vdwg.mxu0
    %v688 = vmul.f32 %v682, 0.1
    %v689 = vmul.f32 %v685, 0.1
    %v690 = vmax.f32 %v682, %v688
    %v691 = vmax.f32 %v685, %v689
    %v692 = vpack.c.bf16 %v691, %v690
    %v693 = vld [vmem:[#allocation10] sm:$0xf]
    %v694 = vld [vmem:[#allocation10 + $0x4] sm:$0xf]
    %v695 = vld [vmem:[#allocation10 + $0x8] sm:$0xf]
    %v696 = vld [vmem:[#allocation10 + $0xc] sm:$0xf]
    %v697 = vld [vmem:[#allocation10 + $0x10] sm:$0xf]
    %v698 = vld [vmem:[#allocation10 + $0x14] sm:$0xf]
    %v699 = vld [vmem:[#allocation10 + $0x18] sm:$0xf]
    %v700 = vld [vmem:[#allocation10 + $0x1c] sm:$0xf]
    %v701 = vld [vmem:[#allocation10 + $0x20] sm:$0xf]
    %v702 = vld [vmem:[#allocation10 + $0x24] sm:$0xf]
    %v703 = vld [vmem:[#allocation10 + $0x28] sm:$0xf]
    %v704 = vld [vmem:[#allocation10 + $0x2c] sm:$0xf]
    %v705 = vld [vmem:[#allocation10 + $0x30] sm:$0xf]
    %v706 = vld [vmem:[#allocation10 + $0x34] sm:$0xf]
    %v707 = vld [vmem:[#allocation10 + $0x38] sm:$0xf]
    %v708 = vld [vmem:[#allocation10 + $0x3c] sm:$0xf]
    %v709 = vld [vmem:[%s10] sm:$0x1]
    %v711 = vlaneseq
    %v712 = vshrl.u32 %v711, 7
    %v713 = vsub.s32 0, %v712
    %v714 = vrot.slane %v709, %v713
    %v732 = vunpack.c.l.b16 %v693
    %v733 = vunpack.c.l.b16 %v694
    %v734 = vunpack.c.l.b16 %v695
    %v735 = vunpack.c.l.b16 %v696
    %v736 = vunpack.c.l.b16 %v697
    %v737 = vunpack.c.l.b16 %v698
    %v738 = vunpack.c.l.b16 %v699
    %v739 = vunpack.c.l.b16 %v700
    %v740 = vunpack.c.l.b16 %v701
    %v741 = vunpack.c.l.b16 %v702
    %v742 = vunpack.c.l.b16 %v703
    %v743 = vunpack.c.l.b16 %v704
    %v744 = vunpack.c.l.b16 %v705
    %v745 = vunpack.c.l.b16 %v706
    %v746 = vunpack.c.l.b16 %v707
    %v747 = vunpack.c.l.b16 %v708
    %v748 = vpack.c.b16 %v733, %v732
    %v749 = vpack.c.b16 %v735, %v734
    %v750 = vpack.c.b16 %v737, %v736
    %v751 = vpack.c.b16 %v739, %v738
    %v752 = vpack.c.b16 %v741, %v740
    %v753 = vpack.c.b16 %v743, %v742
    %v754 = vpack.c.b16 %v745, %v744
    %v755 = vpack.c.b16 %v747, %v746
    %764 = vmatprep.subr.bf16.mxu0 0
    %765 = vmatpush1.bf16.msra.mxu0 %v748
    %766 = vmatprep.subr.bf16.mxu0 0
    %767 = vmatpush1.bf16.msra.mxu0 %v749
    %768 = vmatprep.subr.bf16.mxu0 0
    %769 = vmatpush1.bf16.msra.mxu0 %v750
    %770 = vmatprep.subr.bf16.mxu0 0
    %771 = vmatpush1.bf16.msra.mxu0 %v751
    %772 = vmatprep.subr.bf16.mxu0 0
    %773 = vmatpush1.bf16.msra.mxu0 %v752
    %774 = vmatprep.subr.bf16.mxu0 0
    %775 = vmatpush1.bf16.msra.mxu0 %v753
    %776 = vmatprep.subr.bf16.mxu0 0
    %777 = vmatpush1.bf16.msra.mxu0 %v754
    %778 = vmatprep.subr.bf16.mxu0 0
    %779 = vmatpush1.bf16.msra.mxu0 %v755
    %780 = vmatprep.subr.bf16.mxu0 0
    %781 = vmatpush1.bf16.msra.mxu0 0
    %782 = vmatprep.subr.bf16.mxu0 0
    %783 = vmatpush1.bf16.msra.mxu0 0
    %784 = vmatprep.subr.bf16.mxu0 0
    %785 = vmatpush1.bf16.msra.mxu0 0
    %786 = vmatprep.subr.bf16.mxu0 0
    %787 = vmatpush1.bf16.msra.mxu0 0
    %788 = vmatprep.subr.bf16.mxu0 0
    %789 = vmatpush1.bf16.msra.mxu0 0
    %790 = vmatprep.subr.bf16.mxu0 0
    %791 = vmatpush1.bf16.msra.mxu0 0
    %792 = vmatprep.subr.bf16.mxu0 0
    %793 = vmatpush1.bf16.msra.mxu0 0
    %794 = vmatprep.subr.bf16.mxu0 0
    %795 = vmatpush1.bf16.msra.mxu0 0
    %796 = vmatprep.mubr.bf16.mxu0 0
    %797 = vmatmul.mubr.bf16.gmra.mrb[0].mxu0 %v692
    %v798 = vpop.f32.mrb[0].mxu0
    %v799 = vadd.f32 %v714, %v798
    %v800 = vpop.f32.mrb[0].mxu0
    %v801 = vpop.f32.mrb[0].mxu0
    %v802 = vadd.f32 %v714, %v801
    %v803 = vpop.f32.mrb[0].mxu0
    %804 = vdwg.mxu0
    %v805 = vpack.c.bf16 %v802, %v799
    %v807 = vunpack.c.l.b16 %v805
    %v808 = vunpack.c.h.b16 %v805
    %v809 = vpack.c.b16 %v807, %v807
    %v810 = vpack.c.b16 %v808, %v808
    %813 = vst [vmem:[%s11] sm:$0xf] %v809
    %814 = vst [vmem:[%s11 + $0x4] sm:$0xf] %v810
    // Predicated region
    $region66: #{soccer_outcome_classifier.1} parent=1 // pred_check
      _
    $region67: #{soccer_outcome_classifier.1} parent=1 // pred_check_branch
      %816 = sbr.rel (0) target = $region69
    $region68: #{soccer_outcome_classifier.1} parent=1 // pred_region
      _
    $region69: #{soccer_outcome_classifier.1} parent=1 // pred_fallthru
      _
    // Predicated region
    $region70: #{soccer_outcome_classifier.1} parent=1 // pred_check
      _
    $region71: #{soccer_outcome_classifier.1} parent=1 // pred_check_branch
      %818 = sbr.rel (0) target = $region73
    $region72: #{soccer_outcome_classifier.1} parent=1 // pred_region
      _
    $region73: #{soccer_outcome_classifier.1} parent=1 // pred_fallthru
      _
    %819 = vsyncpa [#allocation4], 1
    %820 = vsyncpa [#allocation6], 1
    %821 = vsyncpa [#allocation9], 1

</llo_original>
